<compile_context>
chip_gen: v7x
topology: tpu7x:2x2x1
jax: 0.10.0
libtpu: 0.0.40
codegen_flags: <defaults>
</compile_context>

<pallas_src>
import functools

import jax
import jax.numpy as jnp
from jax import lax
from jax.experimental import pallas as pl
from jax.experimental.pallas import tpu as pltpu


def lstm_kernel(x_ref, wih_ref, whh_ref, b_ref, out_ref, xg_ref):
    """Single-layer, batch=1, batch_first LSTM; whole (tiny) problem in VMEM.

    x_ref:   (T, D_in)  f32   input sequence
    wih_ref: (D_in, 4H) bf16  input->gates weights (pre-transposed W_ih^T)
    whh_ref: (H, 4H)    bf16  hidden->gates weights (pre-transposed W_hh^T)
    b_ref:   (1, 4H)    f32   b_ih + b_hh
    out_ref: (T, H)     f32   h_t for every t
    xg_ref:  (T, 4H)    f32   VMEM scratch for the hoisted input projection
    """
    T, H = out_ref.shape

    # Hoisted input projection: one (T, D_in) x (D_in, 4H) single-pass bf16 MXU
    # matmul (f32 accumulate) + bias covers every timestep's x-contribution.
    xg = jnp.dot(x_ref[...].astype(jnp.bfloat16), wih_ref[...],
                 preferred_element_type=jnp.float32) + b_ref[...]
    # Spill to VMEM scratch so each step's row fetch is a plain vld (idle slot)
    # instead of sublane extracts sitting next to the critical path.
    xg_ref[...] = xg

    # W_hh^T in bf16: (32, 128) = 2 vregs, stays register-resident across the
    # fully-unrolled loop.
    whh = whh_ref[...]

    # Recurrent state lives in vregs (loop-carried values), never VMEM.
    h = jnp.zeros((1, H), jnp.float32)
    c = jnp.zeros((1, H), jnp.float32)

    # Fully unrolled recurrence (T is small and static): the scheduler sees
    # across iterations and adjacent steps' MXU/EUP latencies overlap.
    for t in range(T):
        # Single-pass bf16 MXU dot (f32 accumulation) on the serial chain.
        gates = xg_ref[t:t + 1, :] + jnp.dot(
            h.astype(jnp.bfloat16), whh, preferred_element_type=jnp.float32)
        # sigmoid(x) = 0.5*(tanh(0.5*x)+1): a single EUP op covers i/f/o (the g
        # lanes of it are unused); tanh on the g slice and on c_new -> 3 EUP
        # pushes per step, all elementwise math in f32.
        sig = 0.5 * (jnp.tanh(0.5 * gates) + 1.0)           # (1, 4H)
        i_g = sig[:, 0 * H:1 * H]
        f_g = sig[:, 1 * H:2 * H]
        o_g = sig[:, 3 * H:4 * H]
        g_g = jnp.tanh(gates[:, 2 * H:3 * H])
        c = f_g * c + i_g * g_g
        h = o_g * jnp.tanh(c)
        # Static-index store; off the recurrent dependency chain, so with the
        # loop unrolled it overlaps the next step's matmul.
        out_ref[pl.ds(t, 1), :] = h.astype(out_ref.dtype)


def init_params(key, inp_hw, out_hw):
    """Deterministic nn.LSTM-style parameters (uniform(-1/sqrt(H), 1/sqrt(H)))."""
    d_in = inp_hw[0] * inp_hw[1]
    H = out_hw[0] * out_hw[1]
    k = 1.0 / float(H) ** 0.5
    k1, k2, k3, k4 = jax.random.split(key, 4)
    u = lambda kk, shape: jax.random.uniform(kk, shape, jnp.float32, -k, k)
    return dict(
        w_ih=u(k1, (4 * H, d_in)),   # PyTorch weight_ih_l0
        w_hh=u(k2, (4 * H, H)),      # PyTorch weight_hh_l0
        b_ih=u(k3, (4 * H,)),
        b_hh=u(k4, (4 * H,)),
    )
    # TODO(synk): Attention.linear / Attention.full_att params are dead code in
    # the reference forward (their results are discarded, Attention returns its
    # input), so they are intentionally not instantiated.


def prepare_params(params):
    """One-time weight prep, hoisted off the per-call hot path.

    Pre-transposes W_ih / W_hh, folds the two biases, and casts the weight
    matrices to bf16 so the kernel's MXU matmuls are single-pass.
    """
    prepared = dict(
        wih_t=jnp.asarray(params["w_ih"].T, jnp.bfloat16),    # (D_in, 4H)
        whh_t=jnp.asarray(params["w_hh"].T, jnp.bfloat16),    # (H,    4H)
        b=(params["b_ih"] + params["b_hh"]).reshape(1, -1).astype(jnp.float32),
    )
    return jax.block_until_ready(prepared)


@functools.partial(jax.jit, static_argnames=("out_hw",))
def lstm_forward(x, wih_t, whh_t, b, *, out_hw):
    """x: (T, H_in, W_in) float32  ->  (1, T, H_out, W_out) float32."""
    T = x.shape[0]
    d_in = x.shape[1] * x.shape[2]
    H = whh_t.shape[0]
    x2d = x.reshape(T, d_in).astype(jnp.float32)              # (T, D_in)

    # Whole-array VMEM blocks: no grid, no BlockSpec tiling, no pipelining,
    # single TensorCore -- the footprint is ~40 KB and the recurrence is serial.
    h_all = pl.pallas_call(
        lstm_kernel,
        out_shape=jax.ShapeDtypeStruct((T, H), jnp.float32),
        in_specs=[pl.BlockSpec(memory_space=pltpu.MemorySpace.VMEM)] * 4,
        out_specs=pl.BlockSpec(memory_space=pltpu.MemorySpace.VMEM),
        scratch_shapes=[pltpu.VMEM((T, 4 * H), jnp.float32)],
    )(x2d, wih_t, whh_t, b)

    # The (no-op) Attention branch and the reshapes around it never permute the
    # flat data, so the module output is just the LSTM h-sequence reshaped.
    return h_all.reshape(1, T, out_hw[0], out_hw[1])


def lstm_reference_fp32(x, params):
    """Pure-JAX reference matching torch.nn.LSTM in full fp32 (gate order i,f,g,o)."""
    T = x.shape[0]
    d_in = x.shape[1] * x.shape[2]
    H = params["w_hh"].shape[1]
    x2d = x.reshape(T, d_in).astype(jnp.float32)
    w_ih_t = params["w_ih"].T
    w_hh_t = params["w_hh"].T
    b = params["b_ih"] + params["b_hh"]
    hp = lax.Precision.HIGHEST

    def step(carry, x_t):
        h, c = carry
        gates = (jnp.dot(x_t, w_ih_t, precision=hp)
                 + jnp.dot(h, w_hh_t, precision=hp) + b)
        i, f, g, o = jnp.split(gates, 4)
        i = jax.nn.sigmoid(i)
        f = jax.nn.sigmoid(f)
        g = jnp.tanh(g)
        o = jax.nn.sigmoid(o)
        c = f * c + i * g
        h = o * jnp.tanh(c)
        return (h, c), h

    init = (jnp.zeros(H, jnp.float32), jnp.zeros(H, jnp.float32))
    _, hs = lax.scan(step, init, x2d)
    return hs                                                  # (T, H)


def lstm_reference_emulated(x, prepared):
    """Pure-JAX reference mirroring the kernel numerics exactly:
    bf16 casts at the MXU dot boundaries, f32 accumulation, tanh-form sigmoid."""
    T = x.shape[0]
    d_in = x.shape[1] * x.shape[2]
    wih = prepared["wih_t"]
    whh = prepared["whh_t"]
    b = prepared["b"]
    H = whh.shape[0]
    x2d = x.reshape(T, d_in).astype(jnp.float32)
    xg = jnp.dot(x2d.astype(jnp.bfloat16), wih,
                 preferred_element_type=jnp.float32) + b
    h = jnp.zeros((1, H), jnp.float32)
    c = jnp.zeros((1, H), jnp.float32)
    hs = []
    for t in range(T):
        gates = xg[t:t + 1, :] + jnp.dot(h.astype(jnp.bfloat16), whh,
                                         preferred_element_type=jnp.float32)
        sig = 0.5 * (jnp.tanh(0.5 * gates) + 1.0)
        i_g = sig[:, 0 * H:1 * H]
        f_g = sig[:, 1 * H:2 * H]
        o_g = sig[:, 3 * H:4 * H]
        g_g = jnp.tanh(gates[:, 2 * H:3 * H])
        c = f_g * c + i_g * g_g
        h = o_g * jnp.tanh(c)
        hs.append(h[0])
    return jnp.stack(hs, axis=0)                               # (T, H)


if __name__ == "__main__":
    # task_train[0]['input'] grid -> (4, 8)  => D_in   = 32
    # task_train[0]['output'] grid -> (4, 8) => hidden = 32
    # forward reshapes to (1, 10, H_out, W_out) => sequence length T = 10
    inp_hw = (4, 8)
    out_hw = (4, 8)
    T = 10

    key = jax.random.PRNGKey(0)
    kx, kp = jax.random.split(key)
    x = jax.random.normal(kx, (T, inp_hw[0], inp_hw[1]), jnp.float32)
    params = init_params(kp, inp_hw, out_hw)
    prepared = prepare_params(params)          # one-time, off the hot path

    out = lstm_forward(x, prepared["wih_t"], prepared["whh_t"], prepared["b"],
                       out_hw=out_hw)
    out = jax.block_until_ready(out)

    assert out.shape == (1, T, out_hw[0], out_hw[1]), out.shape

    # Tight check against a reference that mirrors the kernel's numerics.
    ref_emu = lstm_reference_emulated(x, prepared).reshape(1, T, *out_hw)
    err_emu = float(jnp.max(jnp.abs(out - ref_emu)))
    assert err_emu < 5e-4, f"kernel vs emulated-numerics ref: {err_emu}"

    # Looser parity check against full-fp32 torch.nn.LSTM semantics; the gap is
    # the deliberate bf16 cast at the MXU dot boundaries (single-pass matmuls).
    ref_f32 = lstm_reference_fp32(x, params).reshape(1, T, *out_hw)
    err_f32 = float(jnp.max(jnp.abs(out - ref_f32)))
    assert err_f32 < 3e-2, f"kernel vs fp32 torch-parity ref: {err_f32}"

    print("KERNEL_OK")
</pallas_src>

<mosaic_0001>
module attributes {stable_mosaic.version = 11 : i64} {
  func.func @lstm_kernel(%arg0: memref<10x32xf32, #tpu.memory_space<vmem>>, %arg1: memref<32x128xbf16, #tpu.memory_space<vmem>>, %arg2: memref<32x128xbf16, #tpu.memory_space<vmem>>, %arg3: memref<1x128xf32, #tpu.memory_space<vmem>>, %arg4: memref<10x32xf32, #tpu.memory_space<vmem>>, %arg5: memref<10x128xf32, #tpu.memory_space<vmem>>) attributes {dimension_semantics = [], scalar_prefetch = 0 : i64, scratch_operands = 1 : i64, tpu.core_type = #tpu.core_type<tc>} {
    %c0 = arith.constant 0 : index
    %c0_0 = arith.constant 0 : index
    %0 = vector.load %arg0[%c0, %c0_0] : memref<10x32xf32, #tpu.memory_space<vmem>>, vector<10x32xf32>
    %1 = arith.truncf %0 : vector<10x32xf32> to vector<10x32xbf16>
    %c0_1 = arith.constant 0 : index
    %c0_2 = arith.constant 0 : index
    %2 = vector.load %arg1[%c0_1, %c0_2] : memref<32x128xbf16, #tpu.memory_space<vmem>>, vector<32x128xbf16>
    %cst = arith.constant dense<0.000000e+00> : vector<10x128xf32>
    %3 = tpu.matmul %1, %2, %cst {dimension_numbers = #tpu.dot_dimension_numbers<[1], [0], [0], [1], [0, 0, 1, 1], [], []>} : vector<10x32xbf16>, vector<32x128xbf16>, vector<10x128xf32> -> vector<10x128xf32>
    %c0_3 = arith.constant 0 : index
    %c0_4 = arith.constant 0 : index
    %4 = vector.load %arg3[%c0_3, %c0_4] : memref<1x128xf32, #tpu.memory_space<vmem>>, vector<1x128xf32>
    %5 = vector.broadcast %4 : vector<1x128xf32> to vector<10x128xf32>
    %6 = arith.addf %3, %5 : vector<10x128xf32>
    %c0_5 = arith.constant 0 : index
    %c0_6 = arith.constant 0 : index
    %7 = vector.load %arg5[%c0_5, %c0_6] : memref<10x128xf32, #tpu.memory_space<vmem>>, vector<10x128xf32>
    tpu.vector_store %arg5[%c0_5, %c0_6], %6 {strides = array<i32>} : memref<10x128xf32, #tpu.memory_space<vmem>>, vector<10x128xf32>,
    %c0_7 = arith.constant 0 : index
    %c0_8 = arith.constant 0 : index
    %8 = vector.load %arg2[%c0_7, %c0_8] : memref<32x128xbf16, #tpu.memory_space<vmem>>, vector<32x128xbf16>
    %cst_9 = arith.constant 0.000000e+00 : f32
    %9 = vector.broadcast %cst_9 : f32 to vector<1x32xf32>
    %cst_10 = arith.constant 0.000000e+00 : f32
    %10 = vector.broadcast %cst_10 : f32 to vector<1x32xf32>
    %c0_11 = arith.constant 0 : index
    %c0_12 = arith.constant 0 : index
    %11 = vector.load %arg5[%c0_11, %c0_12] : memref<10x128xf32, #tpu.memory_space<vmem>>, vector<1x128xf32>
    %12 = arith.truncf %9 : vector<1x32xf32> to vector<1x32xbf16>
    %cst_13 = arith.constant dense<0.000000e+00> : vector<1x128xf32>
    %13 = tpu.matmul %12, %8, %cst_13 {dimension_numbers = #tpu.dot_dimension_numbers<[1], [0], [0], [1], [0, 0, 1, 1], [], []>} : vector<1x32xbf16>, vector<32x128xbf16>, vector<1x128xf32> -> vector<1x128xf32>
    %14 = arith.addf %11, %13 : vector<1x128xf32>
    %cst_14 = arith.constant 5.000000e-01 : f32
    %15 = vector.broadcast %cst_14 : f32 to vector<1x128xf32>
    %16 = arith.mulf %15, %14 : vector<1x128xf32>
    %17 = math.tanh %16 : vector<1x128xf32>
    %cst_15 = arith.constant 1.000000e+00 : f32
    %18 = vector.broadcast %cst_15 : f32 to vector<1x128xf32>
    %19 = arith.addf %17, %18 : vector<1x128xf32>
    %cst_16 = arith.constant 5.000000e-01 : f32
    %20 = vector.broadcast %cst_16 : f32 to vector<1x128xf32>
    %21 = arith.mulf %20, %19 : vector<1x128xf32>
    %22 = vector.extract_strided_slice %21 {offsets = [0, 0], sizes = [1, 32], strides = [1, 1]} : vector<1x128xf32> to vector<1x32xf32>
    %23 = vector.extract_strided_slice %21 {offsets = [0, 32], sizes = [1, 32], strides = [1, 1]} : vector<1x128xf32> to vector<1x32xf32>
    %24 = vector.extract_strided_slice %21 {offsets = [0, 96], sizes = [1, 32], strides = [1, 1]} : vector<1x128xf32> to vector<1x32xf32>
    %25 = vector.extract_strided_slice %14 {offsets = [0, 64], sizes = [1, 32], strides = [1, 1]} : vector<1x128xf32> to vector<1x32xf32>
    %26 = math.tanh %25 : vector<1x32xf32>
    %27 = arith.mulf %23, %10 : vector<1x32xf32>
    %28 = arith.mulf %22, %26 : vector<1x32xf32>
    %29 = arith.addf %27, %28 : vector<1x32xf32>
    %30 = math.tanh %29 : vector<1x32xf32>
    %31 = arith.mulf %24, %30 : vector<1x32xf32>
    %c0_17 = arith.constant 0 : index
    %c0_18 = arith.constant 0 : index
    %32 = vector.load %arg4[%c0_17, %c0_18] : memref<10x32xf32, #tpu.memory_space<vmem>>, vector<1x32xf32>
    tpu.vector_store %arg4[%c0_17, %c0_18], %31 {strides = array<i32>} : memref<10x32xf32, #tpu.memory_space<vmem>>, vector<1x32xf32>,
    %c1 = arith.constant 1 : index
    %c0_19 = arith.constant 0 : index
    %33 = vector.load %arg5[%c1, %c0_19] : memref<10x128xf32, #tpu.memory_space<vmem>>, vector<1x128xf32>
    %34 = arith.truncf %31 : vector<1x32xf32> to vector<1x32xbf16>
    %cst_20 = arith.constant dense<0.000000e+00> : vector<1x128xf32>
    %35 = tpu.matmul %34, %8, %cst_20 {dimension_numbers = #tpu.dot_dimension_numbers<[1], [0], [0], [1], [0, 0, 1, 1], [], []>} : vector<1x32xbf16>, vector<32x128xbf16>, vector<1x128xf32> -> vector<1x128xf32>
    %36 = arith.addf %33, %35 : vector<1x128xf32>
    %cst_21 = arith.constant 5.000000e-01 : f32
    %37 = vector.broadcast %cst_21 : f32 to vector<1x128xf32>
    %38 = arith.mulf %37, %36 : vector<1x128xf32>
    %39 = math.tanh %38 : vector<1x128xf32>
    %cst_22 = arith.constant 1.000000e+00 : f32
    %40 = vector.broadcast %cst_22 : f32 to vector<1x128xf32>
    %41 = arith.addf %39, %40 : vector<1x128xf32>
    %cst_23 = arith.constant 5.000000e-01 : f32
    %42 = vector.broadcast %cst_23 : f32 to vector<1x128xf32>
    %43 = arith.mulf %42, %41 : vector<1x128xf32>
    %44 = vector.extract_strided_slice %43 {offsets = [0, 0], sizes = [1, 32], strides = [1, 1]} : vector<1x128xf32> to vector<1x32xf32>
    %45 = vector.extract_strided_slice %43 {offsets = [0, 32], sizes = [1, 32], strides = [1, 1]} : vector<1x128xf32> to vector<1x32xf32>
    %46 = vector.extract_strided_slice %43 {offsets = [0, 96], sizes = [1, 32], strides = [1, 1]} : vector<1x128xf32> to vector<1x32xf32>
    %47 = vector.extract_strided_slice %36 {offsets = [0, 64], sizes = [1, 32], strides = [1, 1]} : vector<1x128xf32> to vector<1x32xf32>
    %48 = math.tanh %47 : vector<1x32xf32>
    %49 = arith.mulf %45, %29 : vector<1x32xf32>
    %50 = arith.mulf %44, %48 : vector<1x32xf32>
    %51 = arith.addf %49, %50 : vector<1x32xf32>
    %52 = math.tanh %51 : vector<1x32xf32>
    %53 = arith.mulf %46, %52 : vector<1x32xf32>
    %c1_24 = arith.constant 1 : index
    %c0_25 = arith.constant 0 : index
    %54 = vector.load %arg4[%c1_24, %c0_25] : memref<10x32xf32, #tpu.memory_space<vmem>>, vector<1x32xf32>
    tpu.vector_store %arg4[%c1_24, %c0_25], %53 {strides = array<i32>} : memref<10x32xf32, #tpu.memory_space<vmem>>, vector<1x32xf32>,
    %c2 = arith.constant 2 : index
    %c0_26 = arith.constant 0 : index
    %55 = vector.load %arg5[%c2, %c0_26] : memref<10x128xf32, #tpu.memory_space<vmem>>, vector<1x128xf32>
    %56 = arith.truncf %53 : vector<1x32xf32> to vector<1x32xbf16>
    %cst_27 = arith.constant dense<0.000000e+00> : vector<1x128xf32>
    %57 = tpu.matmul %56, %8, %cst_27 {dimension_numbers = #tpu.dot_dimension_numbers<[1], [0], [0], [1], [0, 0, 1, 1], [], []>} : vector<1x32xbf16>, vector<32x128xbf16>, vector<1x128xf32> -> vector<1x128xf32>
    %58 = arith.addf %55, %57 : vector<1x128xf32>
    %cst_28 = arith.constant 5.000000e-01 : f32
    %59 = vector.broadcast %cst_28 : f32 to vector<1x128xf32>
    %60 = arith.mulf %59, %58 : vector<1x128xf32>
    %61 = math.tanh %60 : vector<1x128xf32>
    %cst_29 = arith.constant 1.000000e+00 : f32
    %62 = vector.broadcast %cst_29 : f32 to vector<1x128xf32>
    %63 = arith.addf %61, %62 : vector<1x128xf32>
    %cst_30 = arith.constant 5.000000e-01 : f32
    %64 = vector.broadcast %cst_30 : f32 to vector<1x128xf32>
    %65 = arith.mulf %64, %63 : vector<1x128xf32>
    %66 = vector.extract_strided_slice %65 {offsets = [0, 0], sizes = [1, 32], strides = [1, 1]} : vector<1x128xf32> to vector<1x32xf32>
    %67 = vector.extract_strided_slice %65 {offsets = [0, 32], sizes = [1, 32], strides = [1, 1]} : vector<1x128xf32> to vector<1x32xf32>
    %68 = vector.extract_strided_slice %65 {offsets = [0, 96], sizes = [1, 32], strides = [1, 1]} : vector<1x128xf32> to vector<1x32xf32>
    %69 = vector.extract_strided_slice %58 {offsets = [0, 64], sizes = [1, 32], strides = [1, 1]} : vector<1x128xf32> to vector<1x32xf32>
    %70 = math.tanh %69 : vector<1x32xf32>
    %71 = arith.mulf %67, %51 : vector<1x32xf32>
    %72 = arith.mulf %66, %70 : vector<1x32xf32>
    %73 = arith.addf %71, %72 : vector<1x32xf32>
    %74 = math.tanh %73 : vector<1x32xf32>
    %75 = arith.mulf %68, %74 : vector<1x32xf32>
    %c2_31 = arith.constant 2 : index
    %c0_32 = arith.constant 0 : index
    %76 = vector.load %arg4[%c2_31, %c0_32] : memref<10x32xf32, #tpu.memory_space<vmem>>, vector<1x32xf32>
    tpu.vector_store %arg4[%c2_31, %c0_32], %75 {strides = array<i32>} : memref<10x32xf32, #tpu.memory_space<vmem>>, vector<1x32xf32>,
    %c3 = arith.constant 3 : index
    %c0_33 = arith.constant 0 : index
    %77 = vector.load %arg5[%c3, %c0_33] : memref<10x128xf32, #tpu.memory_space<vmem>>, vector<1x128xf32>
    %78 = arith.truncf %75 : vector<1x32xf32> to vector<1x32xbf16>
    %cst_34 = arith.constant dense<0.000000e+00> : vector<1x128xf32>
    %79 = tpu.matmul %78, %8, %cst_34 {dimension_numbers = #tpu.dot_dimension_numbers<[1], [0], [0], [1], [0, 0, 1, 1], [], []>} : vector<1x32xbf16>, vector<32x128xbf16>, vector<1x128xf32> -> vector<1x128xf32>
    %80 = arith.addf %77, %79 : vector<1x128xf32>
    %cst_35 = arith.constant 5.000000e-01 : f32
    %81 = vector.broadcast %cst_35 : f32 to vector<1x128xf32>
    %82 = arith.mulf %81, %80 : vector<1x128xf32>
    %83 = math.tanh %82 : vector<1x128xf32>
    %cst_36 = arith.constant 1.000000e+00 : f32
    %84 = vector.broadcast %cst_36 : f32 to vector<1x128xf32>
    %85 = arith.addf %83, %84 : vector<1x128xf32>
    %cst_37 = arith.constant 5.000000e-01 : f32
    %86 = vector.broadcast %cst_37 : f32 to vector<1x128xf32>
    %87 = arith.mulf %86, %85 : vector<1x128xf32>
    %88 = vector.extract_strided_slice %87 {offsets = [0, 0], sizes = [1, 32], strides = [1, 1]} : vector<1x128xf32> to vector<1x32xf32>
    %89 = vector.extract_strided_slice %87 {offsets = [0, 32], sizes = [1, 32], strides = [1, 1]} : vector<1x128xf32> to vector<1x32xf32>
    %90 = vector.extract_strided_slice %87 {offsets = [0, 96], sizes = [1, 32], strides = [1, 1]} : vector<1x128xf32> to vector<1x32xf32>
    %91 = vector.extract_strided_slice %80 {offsets = [0, 64], sizes = [1, 32], strides = [1, 1]} : vector<1x128xf32> to vector<1x32xf32>
    %92 = math.tanh %91 : vector<1x32xf32>
    %93 = arith.mulf %89, %73 : vector<1x32xf32>
    %94 = arith.mulf %88, %92 : vector<1x32xf32>
    %95 = arith.addf %93, %94 : vector<1x32xf32>
    %96 = math.tanh %95 : vector<1x32xf32>
    %97 = arith.mulf %90, %96 : vector<1x32xf32>
    %c3_38 = arith.constant 3 : index
    %c0_39 = arith.constant 0 : index
    %98 = vector.load %arg4[%c3_38, %c0_39] : memref<10x32xf32, #tpu.memory_space<vmem>>, vector<1x32xf32>
    tpu.vector_store %arg4[%c3_38, %c0_39], %97 {strides = array<i32>} : memref<10x32xf32, #tpu.memory_space<vmem>>, vector<1x32xf32>,
    %c4 = arith.constant 4 : index
    %c0_40 = arith.constant 0 : index
    %99 = vector.load %arg5[%c4, %c0_40] : memref<10x128xf32, #tpu.memory_space<vmem>>, vector<1x128xf32>
    %100 = arith.truncf %97 : vector<1x32xf32> to vector<1x32xbf16>
    %cst_41 = arith.constant dense<0.000000e+00> : vector<1x128xf32>
    %101 = tpu.matmul %100, %8, %cst_41 {dimension_numbers = #tpu.dot_dimension_numbers<[1], [0], [0], [1], [0, 0, 1, 1], [], []>} : vector<1x32xbf16>, vector<32x128xbf16>, vector<1x128xf32> -> vector<1x128xf32>
    %102 = arith.addf %99, %101 : vector<1x128xf32>
    %cst_42 = arith.constant 5.000000e-01 : f32
    %103 = vector.broadcast %cst_42 : f32 to vector<1x128xf32>
    %104 = arith.mulf %103, %102 : vector<1x128xf32>
    %105 = math.tanh %104 : vector<1x128xf32>
    %cst_43 = arith.constant 1.000000e+00 : f32
    %106 = vector.broadcast %cst_43 : f32 to vector<1x128xf32>
    %107 = arith.addf %105, %106 : vector<1x128xf32>
    %cst_44 = arith.constant 5.000000e-01 : f32
    %108 = vector.broadcast %cst_44 : f32 to vector<1x128xf32>
    %109 = arith.mulf %108, %107 : vector<1x128xf32>
    %110 = vector.extract_strided_slice %109 {offsets = [0, 0], sizes = [1, 32], strides = [1, 1]} : vector<1x128xf32> to vector<1x32xf32>
    %111 = vector.extract_strided_slice %109 {offsets = [0, 32], sizes = [1, 32], strides = [1, 1]} : vector<1x128xf32> to vector<1x32xf32>
    %112 = vector.extract_strided_slice %109 {offsets = [0, 96], sizes = [1, 32], strides = [1, 1]} : vector<1x128xf32> to vector<1x32xf32>
    %113 = vector.extract_strided_slice %102 {offsets = [0, 64], sizes = [1, 32], strides = [1, 1]} : vector<1x128xf32> to vector<1x32xf32>
    %114 = math.tanh %113 : vector<1x32xf32>
    %115 = arith.mulf %111, %95 : vector<1x32xf32>
    %116 = arith.mulf %110, %114 : vector<1x32xf32>
    %117 = arith.addf %115, %116 : vector<1x32xf32>
    %118 = math.tanh %117 : vector<1x32xf32>
    %119 = arith.mulf %112, %118 : vector<1x32xf32>
    %c4_45 = arith.constant 4 : index
    %c0_46 = arith.constant 0 : index
    %120 = vector.load %arg4[%c4_45, %c0_46] : memref<10x32xf32, #tpu.memory_space<vmem>>, vector<1x32xf32>
    tpu.vector_store %arg4[%c4_45, %c0_46], %119 {strides = array<i32>} : memref<10x32xf32, #tpu.memory_space<vmem>>, vector<1x32xf32>,
    %c5 = arith.constant 5 : index
    %c0_47 = arith.constant 0 : index
    %121 = vector.load %arg5[%c5, %c0_47] : memref<10x128xf32, #tpu.memory_space<vmem>>, vector<1x128xf32>
    %122 = arith.truncf %119 : vector<1x32xf32> to vector<1x32xbf16>
    %cst_48 = arith.constant dense<0.000000e+00> : vector<1x128xf32>
    %123 = tpu.matmul %122, %8, %cst_48 {dimension_numbers = #tpu.dot_dimension_numbers<[1], [0], [0], [1], [0, 0, 1, 1], [], []>} : vector<1x32xbf16>, vector<32x128xbf16>, vector<1x128xf32> -> vector<1x128xf32>
    %124 = arith.addf %121, %123 : vector<1x128xf32>
    %cst_49 = arith.constant 5.000000e-01 : f32
    %125 = vector.broadcast %cst_49 : f32 to vector<1x128xf32>
    %126 = arith.mulf %125, %124 : vector<1x128xf32>
    %127 = math.tanh %126 : vector<1x128xf32>
    %cst_50 = arith.constant 1.000000e+00 : f32
    %128 = vector.broadcast %cst_50 : f32 to vector<1x128xf32>
    %129 = arith.addf %127, %128 : vector<1x128xf32>
    %cst_51 = arith.constant 5.000000e-01 : f32
    %130 = vector.broadcast %cst_51 : f32 to vector<1x128xf32>
    %131 = arith.mulf %130, %129 : vector<1x128xf32>
    %132 = vector.extract_strided_slice %131 {offsets = [0, 0], sizes = [1, 32], strides = [1, 1]} : vector<1x128xf32> to vector<1x32xf32>
    %133 = vector.extract_strided_slice %131 {offsets = [0, 32], sizes = [1, 32], strides = [1, 1]} : vector<1x128xf32> to vector<1x32xf32>
    %134 = vector.extract_strided_slice %131 {offsets = [0, 96], sizes = [1, 32], strides = [1, 1]} : vector<1x128xf32> to vector<1x32xf32>
    %135 = vector.extract_strided_slice %124 {offsets = [0, 64], sizes = [1, 32], strides = [1, 1]} : vector<1x128xf32> to vector<1x32xf32>
    %136 = math.tanh %135 : vector<1x32xf32>
    %137 = arith.mulf %133, %117 : vector<1x32xf32>
    %138 = arith.mulf %132, %136 : vector<1x32xf32>
    %139 = arith.addf %137, %138 : vector<1x32xf32>
    %140 = math.tanh %139 : vector<1x32xf32>
    %141 = arith.mulf %134, %140 : vector<1x32xf32>
    %c5_52 = arith.constant 5 : index
    %c0_53 = arith.constant 0 : index
    %142 = vector.load %arg4[%c5_52, %c0_53] : memref<10x32xf32, #tpu.memory_space<vmem>>, vector<1x32xf32>
    tpu.vector_store %arg4[%c5_52, %c0_53], %141 {strides = array<i32>} : memref<10x32xf32, #tpu.memory_space<vmem>>, vector<1x32xf32>,
    %c6 = arith.constant 6 : index
    %c0_54 = arith.constant 0 : index
    %143 = vector.load %arg5[%c6, %c0_54] : memref<10x128xf32, #tpu.memory_space<vmem>>, vector<1x128xf32>
    %144 = arith.truncf %141 : vector<1x32xf32> to vector<1x32xbf16>
    %cst_55 = arith.constant dense<0.000000e+00> : vector<1x128xf32>
    %145 = tpu.matmul %144, %8, %cst_55 {dimension_numbers = #tpu.dot_dimension_numbers<[1], [0], [0], [1], [0, 0, 1, 1], [], []>} : vector<1x32xbf16>, vector<32x128xbf16>, vector<1x128xf32> -> vector<1x128xf32>
    %146 = arith.addf %143, %145 : vector<1x128xf32>
    %cst_56 = arith.constant 5.000000e-01 : f32
    %147 = vector.broadcast %cst_56 : f32 to vector<1x128xf32>
    %148 = arith.mulf %147, %146 : vector<1x128xf32>
    %149 = math.tanh %148 : vector<1x128xf32>
    %cst_57 = arith.constant 1.000000e+00 : f32
    %150 = vector.broadcast %cst_57 : f32 to vector<1x128xf32>
    %151 = arith.addf %149, %150 : vector<1x128xf32>
    %cst_58 = arith.constant 5.000000e-01 : f32
    %152 = vector.broadcast %cst_58 : f32 to vector<1x128xf32>
    %153 = arith.mulf %152, %151 : vector<1x128xf32>
    %154 = vector.extract_strided_slice %153 {offsets = [0, 0], sizes = [1, 32], strides = [1, 1]} : vector<1x128xf32> to vector<1x32xf32>
    %155 = vector.extract_strided_slice %153 {offsets = [0, 32], sizes = [1, 32], strides = [1, 1]} : vector<1x128xf32> to vector<1x32xf32>
    %156 = vector.extract_strided_slice %153 {offsets = [0, 96], sizes = [1, 32], strides = [1, 1]} : vector<1x128xf32> to vector<1x32xf32>
    %157 = vector.extract_strided_slice %146 {offsets = [0, 64], sizes = [1, 32], strides = [1, 1]} : vector<1x128xf32> to vector<1x32xf32>
    %158 = math.tanh %157 : vector<1x32xf32>
    %159 = arith.mulf %155, %139 : vector<1x32xf32>
    %160 = arith.mulf %154, %158 : vector<1x32xf32>
    %161 = arith.addf %159, %160 : vector<1x32xf32>
    %162 = math.tanh %161 : vector<1x32xf32>
    %163 = arith.mulf %156, %162 : vector<1x32xf32>
    %c6_59 = arith.constant 6 : index
    %c0_60 = arith.constant 0 : index
    %164 = vector.load %arg4[%c6_59, %c0_60] : memref<10x32xf32, #tpu.memory_space<vmem>>, vector<1x32xf32>
    tpu.vector_store %arg4[%c6_59, %c0_60], %163 {strides = array<i32>} : memref<10x32xf32, #tpu.memory_space<vmem>>, vector<1x32xf32>,
    %c7 = arith.constant 7 : index
    %c0_61 = arith.constant 0 : index
    %165 = vector.load %arg5[%c7, %c0_61] : memref<10x128xf32, #tpu.memory_space<vmem>>, vector<1x128xf32>
    %166 = arith.truncf %163 : vector<1x32xf32> to vector<1x32xbf16>
    %cst_62 = arith.constant dense<0.000000e+00> : vector<1x128xf32>
    %167 = tpu.matmul %166, %8, %cst_62 {dimension_numbers = #tpu.dot_dimension_numbers<[1], [0], [0], [1], [0, 0, 1, 1], [], []>} : vector<1x32xbf16>, vector<32x128xbf16>, vector<1x128xf32> -> vector<1x128xf32>
    %168 = arith.addf %165, %167 : vector<1x128xf32>
    %cst_63 = arith.constant 5.000000e-01 : f32
    %169 = vector.broadcast %cst_63 : f32 to vector<1x128xf32>
    %170 = arith.mulf %169, %168 : vector<1x128xf32>
    %171 = math.tanh %170 : vector<1x128xf32>
    %cst_64 = arith.constant 1.000000e+00 : f32
    %172 = vector.broadcast %cst_64 : f32 to vector<1x128xf32>
    %173 = arith.addf %171, %172 : vector<1x128xf32>
    %cst_65 = arith.constant 5.000000e-01 : f32
    %174 = vector.broadcast %cst_65 : f32 to vector<1x128xf32>
    %175 = arith.mulf %174, %173 : vector<1x128xf32>
    %176 = vector.extract_strided_slice %175 {offsets = [0, 0], sizes = [1, 32], strides = [1, 1]} : vector<1x128xf32> to vector<1x32xf32>
    %177 = vector.extract_strided_slice %175 {offsets = [0, 32], sizes = [1, 32], strides = [1, 1]} : vector<1x128xf32> to vector<1x32xf32>
    %178 = vector.extract_strided_slice %175 {offsets = [0, 96], sizes = [1, 32], strides = [1, 1]} : vector<1x128xf32> to vector<1x32xf32>
    %179 = vector.extract_strided_slice %168 {offsets = [0, 64], sizes = [1, 32], strides = [1, 1]} : vector<1x128xf32> to vector<1x32xf32>
    %180 = math.tanh %179 : vector<1x32xf32>
    %181 = arith.mulf %177, %161 : vector<1x32xf32>
    %182 = arith.mulf %176, %180 : vector<1x32xf32>
    %183 = arith.addf %181, %182 : vector<1x32xf32>
    %184 = math.tanh %183 : vector<1x32xf32>
    %185 = arith.mulf %178, %184 : vector<1x32xf32>
    %c7_66 = arith.constant 7 : index
    %c0_67 = arith.constant 0 : index
    %186 = vector.load %arg4[%c7_66, %c0_67] : memref<10x32xf32, #tpu.memory_space<vmem>>, vector<1x32xf32>
    tpu.vector_store %arg4[%c7_66, %c0_67], %185 {strides = array<i32>} : memref<10x32xf32, #tpu.memory_space<vmem>>, vector<1x32xf32>,
    %c8 = arith.constant 8 : index
    %c0_68 = arith.constant 0 : index
    %187 = vector.load %arg5[%c8, %c0_68] : memref<10x128xf32, #tpu.memory_space<vmem>>, vector<1x128xf32>
    %188 = arith.truncf %185 : vector<1x32xf32> to vector<1x32xbf16>
    %cst_69 = arith.constant dense<0.000000e+00> : vector<1x128xf32>
    %189 = tpu.matmul %188, %8, %cst_69 {dimension_numbers = #tpu.dot_dimension_numbers<[1], [0], [0], [1], [0, 0, 1, 1], [], []>} : vector<1x32xbf16>, vector<32x128xbf16>, vector<1x128xf32> -> vector<1x128xf32>
    %190 = arith.addf %187, %189 : vector<1x128xf32>
    %cst_70 = arith.constant 5.000000e-01 : f32
    %191 = vector.broadcast %cst_70 : f32 to vector<1x128xf32>
    %192 = arith.mulf %191, %190 : vector<1x128xf32>
    %193 = math.tanh %192 : vector<1x128xf32>
    %cst_71 = arith.constant 1.000000e+00 : f32
    %194 = vector.broadcast %cst_71 : f32 to vector<1x128xf32>
    %195 = arith.addf %193, %194 : vector<1x128xf32>
    %cst_72 = arith.constant 5.000000e-01 : f32
    %196 = vector.broadcast %cst_72 : f32 to vector<1x128xf32>
    %197 = arith.mulf %196, %195 : vector<1x128xf32>
    %198 = vector.extract_strided_slice %197 {offsets = [0, 0], sizes = [1, 32], strides = [1, 1]} : vector<1x128xf32> to vector<1x32xf32>
    %199 = vector.extract_strided_slice %197 {offsets = [0, 32], sizes = [1, 32], strides = [1, 1]} : vector<1x128xf32> to vector<1x32xf32>
    %200 = vector.extract_strided_slice %197 {offsets = [0, 96], sizes = [1, 32], strides = [1, 1]} : vector<1x128xf32> to vector<1x32xf32>
    %201 = vector.extract_strided_slice %190 {offsets = [0, 64], sizes = [1, 32], strides = [1, 1]} : vector<1x128xf32> to vector<1x32xf32>
    %202 = math.tanh %201 : vector<1x32xf32>
    %203 = arith.mulf %199, %183 : vector<1x32xf32>
    %204 = arith.mulf %198, %202 : vector<1x32xf32>
    %205 = arith.addf %203, %204 : vector<1x32xf32>
    %206 = math.tanh %205 : vector<1x32xf32>
    %207 = arith.mulf %200, %206 : vector<1x32xf32>
    %c8_73 = arith.constant 8 : index
    %c0_74 = arith.constant 0 : index
    %208 = vector.load %arg4[%c8_73, %c0_74] : memref<10x32xf32, #tpu.memory_space<vmem>>, vector<1x32xf32>
    tpu.vector_store %arg4[%c8_73, %c0_74], %207 {strides = array<i32>} : memref<10x32xf32, #tpu.memory_space<vmem>>, vector<1x32xf32>,
    %c9 = arith.constant 9 : index
    %c0_75 = arith.constant 0 : index
    %209 = vector.load %arg5[%c9, %c0_75] : memref<10x128xf32, #tpu.memory_space<vmem>>, vector<1x128xf32>
    %210 = arith.truncf %207 : vector<1x32xf32> to vector<1x32xbf16>
    %cst_76 = arith.constant dense<0.000000e+00> : vector<1x128xf32>
    %211 = tpu.matmul %210, %8, %cst_76 {dimension_numbers = #tpu.dot_dimension_numbers<[1], [0], [0], [1], [0, 0, 1, 1], [], []>} : vector<1x32xbf16>, vector<32x128xbf16>, vector<1x128xf32> -> vector<1x128xf32>
    %212 = arith.addf %209, %211 : vector<1x128xf32>
    %cst_77 = arith.constant 5.000000e-01 : f32
    %213 = vector.broadcast %cst_77 : f32 to vector<1x128xf32>
    %214 = arith.mulf %213, %212 : vector<1x128xf32>
    %215 = math.tanh %214 : vector<1x128xf32>
    %cst_78 = arith.constant 1.000000e+00 : f32
    %216 = vector.broadcast %cst_78 : f32 to vector<1x128xf32>
    %217 = arith.addf %215, %216 : vector<1x128xf32>
    %cst_79 = arith.constant 5.000000e-01 : f32
    %218 = vector.broadcast %cst_79 : f32 to vector<1x128xf32>
    %219 = arith.mulf %218, %217 : vector<1x128xf32>
    %220 = vector.extract_strided_slice %219 {offsets = [0, 0], sizes = [1, 32], strides = [1, 1]} : vector<1x128xf32> to vector<1x32xf32>
    %221 = vector.extract_strided_slice %219 {offsets = [0, 32], sizes = [1, 32], strides = [1, 1]} : vector<1x128xf32> to vector<1x32xf32>
    %222 = vector.extract_strided_slice %219 {offsets = [0, 96], sizes = [1, 32], strides = [1, 1]} : vector<1x128xf32> to vector<1x32xf32>
    %223 = vector.extract_strided_slice %212 {offsets = [0, 64], sizes = [1, 32], strides = [1, 1]} : vector<1x128xf32> to vector<1x32xf32>
    %224 = math.tanh %223 : vector<1x32xf32>
    %225 = arith.mulf %221, %205 : vector<1x32xf32>
    %226 = arith.mulf %220, %224 : vector<1x32xf32>
    %227 = arith.addf %225, %226 : vector<1x32xf32>
    %228 = math.tanh %227 : vector<1x32xf32>
    %229 = arith.mulf %222, %228 : vector<1x32xf32>
    %c9_80 = arith.constant 9 : index
    %c0_81 = arith.constant 0 : index
    %230 = vector.load %arg4[%c9_80, %c0_81] : memref<10x32xf32, #tpu.memory_space<vmem>>, vector<1x32xf32>
    tpu.vector_store %arg4[%c9_80, %c0_81], %229 {strides = array<i32>} : memref<10x32xf32, #tpu.memory_space<vmem>>, vector<1x32xf32>,
    return
  }
}

</mosaic_0001>

<llo_original>
// kernel: lstm_forward.1
$region0: #{lstm_forward.1}
  #allocation0 [shape = 'u32[]', space=smem, size = 0x4, offset = 0x4, fixed_abs, tag = 'smem constant byte address 0x4 - core index']
  #allocation1 [shape = 'u32[144,128]{1,0:T(1,128)}', space=vmem, size = 0x12000, scoped, tag = 'internal scratch']
  #allocation2 [shape = 'f32[10,128]{1,0:T(8,128)}', space=vmem, size = 0x2000, scoped, tag = 'scratch operand']
  %s0 = inlined_call_operand.vmem [shape: f32[10,32], index: 0, kind: input, shape index: {}]
  %s1 = inlined_call_operand.vmem [shape: bf16[32,128], index: 1, kind: input, shape index: {}]
  %s2 = inlined_call_operand.vmem [shape: bf16[32,128], index: 2, kind: input, shape index: {}]
  %s3 = inlined_call_operand.vmem [shape: f32[1,128], index: 3, kind: input, shape index: {}]
  %s4 = inlined_call_operand.vmem [shape: f32[10,32], index: 4, kind: output, shape index: {}]
  %s5 = sld [smem:[#allocation0]]
  $region26: #{lstm_forward.1} parent=0
    _
  %s7 = ssub.s32 1, %s5
  %s8 = scalar_select 0, %s7, %s5
  // Predicated region
  $region2: #{lstm_forward.1} parent=0 // pred_check
    _
  $region3: #{lstm_forward.1} parent=0 // pred_check_branch
    %10 = sbr.rel (0) target = $region5
  $region4: #{lstm_forward.1} parent=0 // pred_region
    _
  $region5: #{lstm_forward.1} parent=0 // pred_fallthru
    _
  // Predicated region
  $region6: #{lstm_forward.1} parent=0 // pred_check
    _
  $region7: #{lstm_forward.1} parent=0 // pred_check_branch
    %12 = sbr.rel (0) target = $region9
  $region8: #{lstm_forward.1} parent=0 // pred_region
    _
  $region9: #{lstm_forward.1} parent=0 // pred_fallthru
    _
  // Predicated region
  $region10: #{lstm_forward.1} parent=0 // pred_check
    _
  $region11: #{lstm_forward.1} parent=0 // pred_check_branch
    %14 = sbr.rel (0) target = $region13
  $region12: #{lstm_forward.1} parent=0 // pred_region
    _
  $region13: #{lstm_forward.1} parent=0 // pred_fallthru
    _
  // Predicated region
  $region14: #{lstm_forward.1} parent=0 // pred_check
    _
  $region15: #{lstm_forward.1} parent=0 // pred_check_branch
    %16 = sbr.rel (0) target = $region17
  $region16: #{lstm_forward.1} parent=0 // pred_region
    _
  $region17: #{lstm_forward.1} parent=0 // pred_fallthru
    _
  %v18 = vld [vmem:[%s0] sm:$0xff]
  %v19 = vld [vmem:[%s0 + $0x8] sm:$0x3]
  %v20 = vpack.c.bf16 %v19, %v18
  %v21 = vld [vmem:[%s1] sm:$0xf]
  %v22 = vld [vmem:[%s1 + $0x4] sm:$0xf]
  %v23 = vld [vmem:[%s1 + $0x8] sm:$0xf]
  %v24 = vld [vmem:[%s1 + $0xc] sm:$0xf]
  %v25 = vld [vmem:[%s3] sm:$0x1]
  %v27 = vlaneseq
  %v28 = vshrl.u32 %v27, 7
  %v29 = vsub.s32 0, %v28
  %v30 = vrot.slane %v25, %v29
  %v36 = vunpack.c.l.b16 %v21
  %v37 = vunpack.c.l.b16 %v22
  %v38 = vunpack.c.l.b16 %v23
  %v39 = vunpack.c.l.b16 %v24
  %v40 = vpack.c.b16 %v37, %v36
  %v41 = vpack.c.b16 %v39, %v38
  %vm44 = vcmask 261120
  %v46 = vsel %vm44, %v20, 0
  %48 = vmatprep.subr.bf16.mxu0 0
  %49 = vmatpush1.bf16.msra.mxu0 %v40
  %50 = vmatprep.subr.bf16.mxu0 0
  %51 = vmatpush1.bf16.msra.mxu0 %v41
  %52 = vmatprep.subr.bf16.mxu0 0
  %53 = vmatpush1.bf16.msra.mxu0 0
  %54 = vmatprep.subr.bf16.mxu0 0
  %55 = vmatpush1.bf16.msra.mxu0 0
  %56 = vmatprep.subr.bf16.mxu0 0
  %57 = vmatpush1.bf16.msra.mxu0 0
  %58 = vmatprep.subr.bf16.mxu0 0
  %59 = vmatpush1.bf16.msra.mxu0 0
  %60 = vmatprep.subr.bf16.mxu0 0
  %61 = vmatpush1.bf16.msra.mxu0 0
  %62 = vmatprep.subr.bf16.mxu0 0
  %63 = vmatpush1.bf16.msra.mxu0 0
  %64 = vmatprep.subr.bf16.mxu0 0
  %65 = vmatpush1.bf16.msra.mxu0 0
  %66 = vmatprep.subr.bf16.mxu0 0
  %67 = vmatpush1.bf16.msra.mxu0 0
  %68 = vmatprep.subr.bf16.mxu0 0
  %69 = vmatpush1.bf16.msra.mxu0 0
  %70 = vmatprep.subr.bf16.mxu0 0
  %71 = vmatpush1.bf16.msra.mxu0 0
  %72 = vmatprep.subr.bf16.mxu0 0
  %73 = vmatpush1.bf16.msra.mxu0 0
  %74 = vmatprep.subr.bf16.mxu0 0
  %75 = vmatpush1.bf16.msra.mxu0 0
  %76 = vmatprep.subr.bf16.mxu0 0
  %77 = vmatpush1.bf16.msra.mxu0 0
  %78 = vmatprep.subr.bf16.mxu0 0
  %79 = vmatpush1.bf16.msra.mxu0 0
  %80 = vmatprep.mubr.bf16.mxu0 0
  %81 = vmatmul.mubr.bf16.gmra.mrb[0].mxu0 %v46
  %v82 = vpop.f32.mrb[0].mxu0
  %v83 = vadd.f32 %v30, %v82
  %v84 = vpop.f32.mrb[0].mxu0
  %v85 = vpop.f32.mrb[0].mxu0
  %v86 = vadd.f32 %v30, %v85
  %v87 = vpop.f32.mrb[0].mxu0
  %88 = vdwg.mxu0
  %89 = vst [vmem:[#allocation2] sm:$0xff] %v83
  %90 = vst [vmem:[#allocation2 + $0x8] sm:$0x3] %v86
  %v91 = vld [vmem:[%s2] sm:$0xf]
  %v92 = vld [vmem:[%s2 + $0x4] sm:$0xf]
  %v93 = vld [vmem:[%s2 + $0x8] sm:$0xf]
  %v94 = vld [vmem:[%s2 + $0xc] sm:$0xf]
  %v95 = vld [vmem:[#allocation2] sm:$0x1]
  %v100 = vunpack.c.l.b16 %v91
  %v101 = vunpack.c.l.b16 %v92
  %v102 = vunpack.c.l.b16 %v93
  %v103 = vunpack.c.l.b16 %v94
  %v104 = vpack.c.b16 %v101, %v100
  %v105 = vpack.c.b16 %v103, %v102
  %v109 = vsel %vm44, 0, 0
  %111 = vmatprep.subr.bf16.mxu0 0
  %112 = vmatpush1.bf16.msra.mxu0 %v104
  %113 = vmatprep.subr.bf16.mxu0 0
  %114 = vmatpush1.bf16.msra.mxu0 %v105
  %115 = vmatprep.subr.bf16.mxu0 0
  %116 = vmatpush1.bf16.msra.mxu0 0
  %117 = vmatprep.subr.bf16.mxu0 0
  %118 = vmatpush1.bf16.msra.mxu0 0
  %119 = vmatprep.subr.bf16.mxu0 0
  %120 = vmatpush1.bf16.msra.mxu0 0
  %121 = vmatprep.subr.bf16.mxu0 0
  %122 = vmatpush1.bf16.msra.mxu0 0
  %123 = vmatprep.subr.bf16.mxu0 0
  %124 = vmatpush1.bf16.msra.mxu0 0
  %125 = vmatprep.subr.bf16.mxu0 0
  %126 = vmatpush1.bf16.msra.mxu0 0
  %127 = vmatprep.subr.bf16.mxu0 0
  %128 = vmatpush1.bf16.msra.mxu0 0
  %129 = vmatprep.subr.bf16.mxu0 0
  %130 = vmatpush1.bf16.msra.mxu0 0
  %131 = vmatprep.subr.bf16.mxu0 0
  %132 = vmatpush1.bf16.msra.mxu0 0
  %133 = vmatprep.subr.bf16.mxu0 0
  %134 = vmatpush1.bf16.msra.mxu0 0
  %135 = vmatprep.subr.bf16.mxu0 0
  %136 = vmatpush1.bf16.msra.mxu0 0
  %137 = vmatprep.subr.bf16.mxu0 0
  %138 = vmatpush1.bf16.msra.mxu0 0
  %139 = vmatprep.subr.bf16.mxu0 0
  %140 = vmatpush1.bf16.msra.mxu0 0
  %141 = vmatprep.subr.bf16.mxu0 0
  %142 = vmatpush1.bf16.msra.mxu0 0
  %143 = vmatprep.mubr.bf16.mxu0 0
  %144 = vmatmul.mubr.bf16.gmra.mrb[0].mxu0 %v109
  %v145 = vpop.f32.mrb[0].mxu0
  %v146 = vadd.f32 0.0, %v145
  %v147 = vpop.f32.mrb[0].mxu0
  %v148 = vpop.f32.mrb[0].mxu0
  %v149 = vpop.f32.mrb[0].mxu0
  %150 = vdwg.mxu0
  %v151 = vadd.f32 %v95, %v146
  %v152 = vmul.f32 %v151, 0.5
  %v153 = vtanh.pop %v152
  %v154 = vadd.f32 %v153, 1.0
  %v155 = vmul.f32 %v154, 0.5
  %v156 = vtanh.pop %v151
  %v157 = vmul.f32 %v155, 0.0
  %159 = vrot.lane.b32.xlu0 %v156, 64
  %v160 = vpop.permute.xlu0 %159
  %v162 = vmul.f32 %v155, %v160
  %164 = vrot.lane.b32.xlu0 %v162, 32
  %v165 = vpop.permute.xlu0 %164
  %v167 = vadd.f32 %v157, %v165
  %v168 = vtanh.pop %v167
  %170 = vrot.lane.b32.xlu0 %v168, 64
  %v171 = vpop.permute.xlu0 %170
  %v173 = vmul.f32 %v155, %v171
  %175 = vrot.lane.b32.xlu0 %v173, 32
  %v176 = vpop.permute.xlu0 %175
  %vm178 = vcmask 253952
  %179 = vst.msk [vmem:[%s4] sm:$0x1] %vm178, %v176
  %v180 = vld [vmem:[#allocation2 + $0x1] sm:$0x1]
  %v181 = vpack.c.bf16 %v173, %v173
  %183 = vrot.lane.b32.xlu0 %v181, 32
  %v184 = vpop.permute.xlu0 %183
  %v186 = vsel %vm44, %v184, 0
  %188 = vmatprep.subr.bf16.mxu0 0
  %189 = vmatpush1.bf16.msra.mxu0 %v104
  %190 = vmatprep.subr.bf16.mxu0 0
  %191 = vmatpush1.bf16.msra.mxu0 %v105
  %192 = vmatprep.subr.bf16.mxu0 0
  %193 = vmatpush1.bf16.msra.mxu0 0
  %194 = vmatprep.subr.bf16.mxu0 0
  %195 = vmatpush1.bf16.msra.mxu0 0
  %196 = vmatprep.subr.bf16.mxu0 0
  %197 = vmatpush1.bf16.msra.mxu0 0
  %198 = vmatprep.subr.bf16.mxu0 0
  %199 = vmatpush1.bf16.msra.mxu0 0
  %200 = vmatprep.subr.bf16.mxu0 0
  %201 = vmatpush1.bf16.msra.mxu0 0
  %202 = vmatprep.subr.bf16.mxu0 0
  %203 = vmatpush1.bf16.msra.mxu0 0
  %204 = vmatprep.subr.bf16.mxu0 0
  %205 = vmatpush1.bf16.msra.mxu0 0
  %206 = vmatprep.subr.bf16.mxu0 0
  %207 = vmatpush1.bf16.msra.mxu0 0
  %208 = vmatprep.subr.bf16.mxu0 0
  %209 = vmatpush1.bf16.msra.mxu0 0
  %210 = vmatprep.subr.bf16.mxu0 0
  %211 = vmatpush1.bf16.msra.mxu0 0
  %212 = vmatprep.subr.bf16.mxu0 0
  %213 = vmatpush1.bf16.msra.mxu0 0
  %214 = vmatprep.subr.bf16.mxu0 0
  %215 = vmatpush1.bf16.msra.mxu0 0
  %216 = vmatprep.subr.bf16.mxu0 0
  %217 = vmatpush1.bf16.msra.mxu0 0
  %218 = vmatprep.subr.bf16.mxu0 0
  %219 = vmatpush1.bf16.msra.mxu0 0
  %220 = vmatprep.mubr.bf16.mxu0 0
  %221 = vmatmul.mubr.bf16.gmra.mrb[0].mxu0 %v186
  %v222 = vpop.f32.mrb[0].mxu0
  %v223 = vadd.f32 0.0, %v222
  %v224 = vpop.f32.mrb[0].mxu0
  %v225 = vpop.f32.mrb[0].mxu0
  %v226 = vpop.f32.mrb[0].mxu0
  %227 = vdwg.mxu0
  %v228 = vadd.f32 %v180, %v223
  %v229 = vmul.f32 %v228, 0.5
  %v230 = vtanh.pop %v229
  %v231 = vadd.f32 %v230, 1.0
  %v232 = vmul.f32 %v231, 0.5
  %v233 = vtanh.pop %v228
  %v234 = vmul.f32 %v232, %v167
  %236 = vrot.lane.b32.xlu0 %v233, 64
  %v237 = vpop.permute.xlu0 %236
  %v239 = vmul.f32 %v232, %v237
  %241 = vrot.lane.b32.xlu0 %v239, 32
  %v242 = vpop.permute.xlu0 %241
  %v244 = vadd.f32 %v234, %v242
  %v245 = vtanh.pop %v244
  %247 = vrot.lane.b32.xlu0 %v245, 64
  %v248 = vpop.permute.xlu0 %247
  %v250 = vmul.f32 %v232, %v248
  %252 = vrot.lane.b32.xlu0 %v250, 32
  %v253 = vpop.permute.xlu0 %252
  %255 = vst.msk [vmem:[%s4 + $0x1] sm:$0x1] %vm178, %v253
  %v256 = vld [vmem:[#allocation2 + $0x2] sm:$0x1]
  %v257 = vpack.c.bf16 %v250, %v250
  %259 = vrot.lane.b32.xlu0 %v257, 32
  %v260 = vpop.permute.xlu0 %259
  %v262 = vsel %vm44, %v260, 0
  %264 = vmatprep.subr.bf16.mxu0 0
  %265 = vmatpush1.bf16.msra.mxu0 %v104
  %266 = vmatprep.subr.bf16.mxu0 0
  %267 = vmatpush1.bf16.msra.mxu0 %v105
  %268 = vmatprep.subr.bf16.mxu0 0
  %269 = vmatpush1.bf16.msra.mxu0 0
  %270 = vmatprep.subr.bf16.mxu0 0
  %271 = vmatpush1.bf16.msra.mxu0 0
  %272 = vmatprep.subr.bf16.mxu0 0
  %273 = vmatpush1.bf16.msra.mxu0 0
  %274 = vmatprep.subr.bf16.mxu0 0
  %275 = vmatpush1.bf16.msra.mxu0 0
  %276 = vmatprep.subr.bf16.mxu0 0
  %277 = vmatpush1.bf16.msra.mxu0 0
  %278 = vmatprep.subr.bf16.mxu0 0
  %279 = vmatpush1.bf16.msra.mxu0 0
  %280 = vmatprep.subr.bf16.mxu0 0
  %281 = vmatpush1.bf16.msra.mxu0 0
  %282 = vmatprep.subr.bf16.mxu0 0
  %283 = vmatpush1.bf16.msra.mxu0 0
  %284 = vmatprep.subr.bf16.mxu0 0
  %285 = vmatpush1.bf16.msra.mxu0 0
  %286 = vmatprep.subr.bf16.mxu0 0
  %287 = vmatpush1.bf16.msra.mxu0 0
  %288 = vmatprep.subr.bf16.mxu0 0
  %289 = vmatpush1.bf16.msra.mxu0 0
  %290 = vmatprep.subr.bf16.mxu0 0
  %291 = vmatpush1.bf16.msra.mxu0 0
  %292 = vmatprep.subr.bf16.mxu0 0
  %293 = vmatpush1.bf16.msra.mxu0 0
  %294 = vmatprep.subr.bf16.mxu0 0
  %295 = vmatpush1.bf16.msra.mxu0 0
  %296 = vmatprep.mubr.bf16.mxu0 0
  %297 = vmatmul.mubr.bf16.gmra.mrb[0].mxu0 %v262
  %v298 = vpop.f32.mrb[0].mxu0
  %v299 = vadd.f32 0.0, %v298
  %v300 = vpop.f32.mrb[0].mxu0
  %v301 = vpop.f32.mrb[0].mxu0
  %v302 = vpop.f32.mrb[0].mxu0
  %303 = vdwg.mxu0
  %v304 = vadd.f32 %v256, %v299
  %v305 = vmul.f32 %v304, 0.5
  %v306 = vtanh.pop %v305
  %v307 = vadd.f32 %v306, 1.0
  %v308 = vmul.f32 %v307, 0.5
  %v309 = vtanh.pop %v304
  %v310 = vmul.f32 %v308, %v244
  %312 = vrot.lane.b32.xlu0 %v309, 64
  %v313 = vpop.permute.xlu0 %312
  %v315 = vmul.f32 %v308, %v313
  %317 = vrot.lane.b32.xlu0 %v315, 32
  %v318 = vpop.permute.xlu0 %317
  %v320 = vadd.f32 %v310, %v318
  %v321 = vtanh.pop %v320
  %323 = vrot.lane.b32.xlu0 %v321, 64
  %v324 = vpop.permute.xlu0 %323
  %v326 = vmul.f32 %v308, %v324
  %328 = vrot.lane.b32.xlu0 %v326, 32
  %v329 = vpop.permute.xlu0 %328
  %331 = vst.msk [vmem:[%s4 + $0x2] sm:$0x1] %vm178, %v329
  %v332 = vld [vmem:[#allocation2 + $0x3] sm:$0x1]
  %v333 = vpack.c.bf16 %v326, %v326
  %335 = vrot.lane.b32.xlu0 %v333, 32
  %v336 = vpop.permute.xlu0 %335
  %v338 = vsel %vm44, %v336, 0
  %340 = vmatprep.subr.bf16.mxu0 0
  %341 = vmatpush1.bf16.msra.mxu0 %v104
  %342 = vmatprep.subr.bf16.mxu0 0
  %343 = vmatpush1.bf16.msra.mxu0 %v105
  %344 = vmatprep.subr.bf16.mxu0 0
  %345 = vmatpush1.bf16.msra.mxu0 0
  %346 = vmatprep.subr.bf16.mxu0 0
  %347 = vmatpush1.bf16.msra.mxu0 0
  %348 = vmatprep.subr.bf16.mxu0 0
  %349 = vmatpush1.bf16.msra.mxu0 0
  %350 = vmatprep.subr.bf16.mxu0 0
  %351 = vmatpush1.bf16.msra.mxu0 0
  %352 = vmatprep.subr.bf16.mxu0 0
  %353 = vmatpush1.bf16.msra.mxu0 0
  %354 = vmatprep.subr.bf16.mxu0 0
  %355 = vmatpush1.bf16.msra.mxu0 0
  %356 = vmatprep.subr.bf16.mxu0 0
  %357 = vmatpush1.bf16.msra.mxu0 0
  %358 = vmatprep.subr.bf16.mxu0 0
  %359 = vmatpush1.bf16.msra.mxu0 0
  %360 = vmatprep.subr.bf16.mxu0 0
  %361 = vmatpush1.bf16.msra.mxu0 0
  %362 = vmatprep.subr.bf16.mxu0 0
  %363 = vmatpush1.bf16.msra.mxu0 0
  %364 = vmatprep.subr.bf16.mxu0 0
  %365 = vmatpush1.bf16.msra.mxu0 0
  %366 = vmatprep.subr.bf16.mxu0 0
  %367 = vmatpush1.bf16.msra.mxu0 0
  %368 = vmatprep.subr.bf16.mxu0 0
  %369 = vmatpush1.bf16.msra.mxu0 0
  %370 = vmatprep.subr.bf16.mxu0 0
  %371 = vmatpush1.bf16.msra.mxu0 0
  %372 = vmatprep.mubr.bf16.mxu0 0
  %373 = vmatmul.mubr.bf16.gmra.mrb[0].mxu0 %v338
  %v374 = vpop.f32.mrb[0].mxu0
  %v375 = vadd.f32 0.0, %v374
  %v376 = vpop.f32.mrb[0].mxu0
  %v377 = vpop.f32.mrb[0].mxu0
  %v378 = vpop.f32.mrb[0].mxu0
  %379 = vdwg.mxu0
  %v380 = vadd.f32 %v332, %v375
  %v381 = vmul.f32 %v380, 0.5
  %v382 = vtanh.pop %v381
  %v383 = vadd.f32 %v382, 1.0
  %v384 = vmul.f32 %v383, 0.5
  %v385 = vtanh.pop %v380
  %v386 = vmul.f32 %v384, %v320
  %388 = vrot.lane.b32.xlu0 %v385, 64
  %v389 = vpop.permute.xlu0 %388
  %v391 = vmul.f32 %v384, %v389
  %393 = vrot.lane.b32.xlu0 %v391, 32
  %v394 = vpop.permute.xlu0 %393
  %v396 = vadd.f32 %v386, %v394
  %v397 = vtanh.pop %v396
  %399 = vrot.lane.b32.xlu0 %v397, 64
  %v400 = vpop.permute.xlu0 %399
  %v402 = vmul.f32 %v384, %v400
  %404 = vrot.lane.b32.xlu0 %v402, 32
  %v405 = vpop.permute.xlu0 %404
  %407 = vst.msk [vmem:[%s4 + $0x3] sm:$0x1] %vm178, %v405
  %v408 = vld [vmem:[#allocation2 + $0x4] sm:$0x1]
  %v409 = vpack.c.bf16 %v402, %v402
  %411 = vrot.lane.b32.xlu0 %v409, 32
  %v412 = vpop.permute.xlu0 %411
  %v414 = vsel %vm44, %v412, 0
  %416 = vmatprep.subr.bf16.mxu0 0
  %417 = vmatpush1.bf16.msra.mxu0 %v104
  %418 = vmatprep.subr.bf16.mxu0 0
  %419 = vmatpush1.bf16.msra.mxu0 %v105
  %420 = vmatprep.subr.bf16.mxu0 0
  %421 = vmatpush1.bf16.msra.mxu0 0
  %422 = vmatprep.subr.bf16.mxu0 0
  %423 = vmatpush1.bf16.msra.mxu0 0
  %424 = vmatprep.subr.bf16.mxu0 0
  %425 = vmatpush1.bf16.msra.mxu0 0
  %426 = vmatprep.subr.bf16.mxu0 0
  %427 = vmatpush1.bf16.msra.mxu0 0
  %428 = vmatprep.subr.bf16.mxu0 0
  %429 = vmatpush1.bf16.msra.mxu0 0
  %430 = vmatprep.subr.bf16.mxu0 0
  %431 = vmatpush1.bf16.msra.mxu0 0
  %432 = vmatprep.subr.bf16.mxu0 0
  %433 = vmatpush1.bf16.msra.mxu0 0
  %434 = vmatprep.subr.bf16.mxu0 0
  %435 = vmatpush1.bf16.msra.mxu0 0
  %436 = vmatprep.subr.bf16.mxu0 0
  %437 = vmatpush1.bf16.msra.mxu0 0
  %438 = vmatprep.subr.bf16.mxu0 0
  %439 = vmatpush1.bf16.msra.mxu0 0
  %440 = vmatprep.subr.bf16.mxu0 0
  %441 = vmatpush1.bf16.msra.mxu0 0
  %442 = vmatprep.subr.bf16.mxu0 0
  %443 = vmatpush1.bf16.msra.mxu0 0
  %444 = vmatprep.subr.bf16.mxu0 0
  %445 = vmatpush1.bf16.msra.mxu0 0
  %446 = vmatprep.subr.bf16.mxu0 0
  %447 = vmatpush1.bf16.msra.mxu0 0
  %448 = vmatprep.mubr.bf16.mxu0 0
  %449 = vmatmul.mubr.bf16.gmra.mrb[0].mxu0 %v414
  %v450 = vpop.f32.mrb[0].mxu0
  %v451 = vadd.f32 0.0, %v450
  %v452 = vpop.f32.mrb[0].mxu0
  %v453 = vpop.f32.mrb[0].mxu0
  %v454 = vpop.f32.mrb[0].mxu0
  %455 = vdwg.mxu0
  %v456 = vadd.f32 %v408, %v451
  %v457 = vmul.f32 %v456, 0.5
  %v458 = vtanh.pop %v457
  %v459 = vadd.f32 %v458, 1.0
  %v460 = vmul.f32 %v459, 0.5
  %v461 = vtanh.pop %v456
  %v462 = vmul.f32 %v460, %v396
  %464 = vrot.lane.b32.xlu0 %v461, 64
  %v465 = vpop.permute.xlu0 %464
  %v467 = vmul.f32 %v460, %v465
  %469 = vrot.lane.b32.xlu0 %v467, 32
  %v470 = vpop.permute.xlu0 %469
  %v472 = vadd.f32 %v462, %v470
  %v473 = vtanh.pop %v472
  %475 = vrot.lane.b32.xlu0 %v473, 64
  %v476 = vpop.permute.xlu0 %475
  %v478 = vmul.f32 %v460, %v476
  %480 = vrot.lane.b32.xlu0 %v478, 32
  %v481 = vpop.permute.xlu0 %480
  %483 = vst.msk [vmem:[%s4 + $0x4] sm:$0x1] %vm178, %v481
  %v484 = vld [vmem:[#allocation2 + $0x5] sm:$0x1]
  %v485 = vpack.c.bf16 %v478, %v478
  %487 = vrot.lane.b32.xlu0 %v485, 32
  %v488 = vpop.permute.xlu0 %487
  %v490 = vsel %vm44, %v488, 0
  %492 = vmatprep.subr.bf16.mxu0 0
  %493 = vmatpush1.bf16.msra.mxu0 %v104
  %494 = vmatprep.subr.bf16.mxu0 0
  %495 = vmatpush1.bf16.msra.mxu0 %v105
  %496 = vmatprep.subr.bf16.mxu0 0
  %497 = vmatpush1.bf16.msra.mxu0 0
  %498 = vmatprep.subr.bf16.mxu0 0
  %499 = vmatpush1.bf16.msra.mxu0 0
  %500 = vmatprep.subr.bf16.mxu0 0
  %501 = vmatpush1.bf16.msra.mxu0 0
  %502 = vmatprep.subr.bf16.mxu0 0
  %503 = vmatpush1.bf16.msra.mxu0 0
  %504 = vmatprep.subr.bf16.mxu0 0
  %505 = vmatpush1.bf16.msra.mxu0 0
  %506 = vmatprep.subr.bf16.mxu0 0
  %507 = vmatpush1.bf16.msra.mxu0 0
  %508 = vmatprep.subr.bf16.mxu0 0
  %509 = vmatpush1.bf16.msra.mxu0 0
  %510 = vmatprep.subr.bf16.mxu0 0
  %511 = vmatpush1.bf16.msra.mxu0 0
  %512 = vmatprep.subr.bf16.mxu0 0
  %513 = vmatpush1.bf16.msra.mxu0 0
  %514 = vmatprep.subr.bf16.mxu0 0
  %515 = vmatpush1.bf16.msra.mxu0 0
  %516 = vmatprep.subr.bf16.mxu0 0
  %517 = vmatpush1.bf16.msra.mxu0 0
  %518 = vmatprep.subr.bf16.mxu0 0
  %519 = vmatpush1.bf16.msra.mxu0 0
  %520 = vmatprep.subr.bf16.mxu0 0
  %521 = vmatpush1.bf16.msra.mxu0 0
  %522 = vmatprep.subr.bf16.mxu0 0
  %523 = vmatpush1.bf16.msra.mxu0 0
  %524 = vmatprep.mubr.bf16.mxu0 0
  %525 = vmatmul.mubr.bf16.gmra.mrb[0].mxu0 %v490
  %v526 = vpop.f32.mrb[0].mxu0
  %v527 = vadd.f32 0.0, %v526
  %v528 = vpop.f32.mrb[0].mxu0
  %v529 = vpop.f32.mrb[0].mxu0
  %v530 = vpop.f32.mrb[0].mxu0
  %531 = vdwg.mxu0
  %v532 = vadd.f32 %v484, %v527
  %v533 = vmul.f32 %v532, 0.5
  %v534 = vtanh.pop %v533
  %v535 = vadd.f32 %v534, 1.0
  %v536 = vmul.f32 %v535, 0.5
  %v537 = vtanh.pop %v532
  %v538 = vmul.f32 %v536, %v472
  %540 = vrot.lane.b32.xlu0 %v537, 64
  %v541 = vpop.permute.xlu0 %540
  %v543 = vmul.f32 %v536, %v541
  %545 = vrot.lane.b32.xlu0 %v543, 32
  %v546 = vpop.permute.xlu0 %545
  %v548 = vadd.f32 %v538, %v546
  %v549 = vtanh.pop %v548
  %551 = vrot.lane.b32.xlu0 %v549, 64
  %v552 = vpop.permute.xlu0 %551
  %v554 = vmul.f32 %v536, %v552
  %556 = vrot.lane.b32.xlu0 %v554, 32
  %v557 = vpop.permute.xlu0 %556
  %559 = vst.msk [vmem:[%s4 + $0x5] sm:$0x1] %vm178, %v557
  %v560 = vld [vmem:[#allocation2 + $0x6] sm:$0x1]
  %v561 = vpack.c.bf16 %v554, %v554
  %563 = vrot.lane.b32.xlu0 %v561, 32
  %v564 = vpop.permute.xlu0 %563
  %v566 = vsel %vm44, %v564, 0
  %568 = vmatprep.subr.bf16.mxu0 0
  %569 = vmatpush1.bf16.msra.mxu0 %v104
  %570 = vmatprep.subr.bf16.mxu0 0
  %571 = vmatpush1.bf16.msra.mxu0 %v105
  %572 = vmatprep.subr.bf16.mxu0 0
  %573 = vmatpush1.bf16.msra.mxu0 0
  %574 = vmatprep.subr.bf16.mxu0 0
  %575 = vmatpush1.bf16.msra.mxu0 0
  %576 = vmatprep.subr.bf16.mxu0 0
  %577 = vmatpush1.bf16.msra.mxu0 0
  %578 = vmatprep.subr.bf16.mxu0 0
  %579 = vmatpush1.bf16.msra.mxu0 0
  %580 = vmatprep.subr.bf16.mxu0 0
  %581 = vmatpush1.bf16.msra.mxu0 0
  %582 = vmatprep.subr.bf16.mxu0 0
  %583 = vmatpush1.bf16.msra.mxu0 0
  %584 = vmatprep.subr.bf16.mxu0 0
  %585 = vmatpush1.bf16.msra.mxu0 0
  %586 = vmatprep.subr.bf16.mxu0 0
  %587 = vmatpush1.bf16.msra.mxu0 0
  %588 = vmatprep.subr.bf16.mxu0 0
  %589 = vmatpush1.bf16.msra.mxu0 0
  %590 = vmatprep.subr.bf16.mxu0 0
  %591 = vmatpush1.bf16.msra.mxu0 0
  %592 = vmatprep.subr.bf16.mxu0 0
  %593 = vmatpush1.bf16.msra.mxu0 0
  %594 = vmatprep.subr.bf16.mxu0 0
  %595 = vmatpush1.bf16.msra.mxu0 0
  %596 = vmatprep.subr.bf16.mxu0 0
  %597 = vmatpush1.bf16.msra.mxu0 0
  %598 = vmatprep.subr.bf16.mxu0 0
  %599 = vmatpush1.bf16.msra.mxu0 0
  %600 = vmatprep.mubr.bf16.mxu0 0
  %601 = vmatmul.mubr.bf16.gmra.mrb[0].mxu0 %v566
  %v602 = vpop.f32.mrb[0].mxu0
  %v603 = vadd.f32 0.0, %v602
  %v604 = vpop.f32.mrb[0].mxu0
  %v605 = vpop.f32.mrb[0].mxu0
  %v606 = vpop.f32.mrb[0].mxu0
  %607 = vdwg.mxu0
  %v608 = vadd.f32 %v560, %v603
  %v609 = vmul.f32 %v608, 0.5
  %v610 = vtanh.pop %v609
  %v611 = vadd.f32 %v610, 1.0
  %v612 = vmul.f32 %v611, 0.5
  %v613 = vtanh.pop %v608
  %v614 = vmul.f32 %v612, %v548
  %616 = vrot.lane.b32.xlu0 %v613, 64
  %v617 = vpop.permute.xlu0 %616
  %v619 = vmul.f32 %v612, %v617
  %621 = vrot.lane.b32.xlu0 %v619, 32
  %v622 = vpop.permute.xlu0 %621
  %v624 = vadd.f32 %v614, %v622
  %v625 = vtanh.pop %v624
  %627 = vrot.lane.b32.xlu0 %v625, 64
  %v628 = vpop.permute.xlu0 %627
  %v630 = vmul.f32 %v612, %v628
  %632 = vrot.lane.b32.xlu0 %v630, 32
  %v633 = vpop.permute.xlu0 %632
  %635 = vst.msk [vmem:[%s4 + $0x6] sm:$0x1] %vm178, %v633
  %v636 = vld [vmem:[#allocation2 + $0x7] sm:$0x1]
  %v637 = vpack.c.bf16 %v630, %v630
  %639 = vrot.lane.b32.xlu0 %v637, 32
  %v640 = vpop.permute.xlu0 %639
  %v642 = vsel %vm44, %v640, 0
  %644 = vmatprep.subr.bf16.mxu0 0
  %645 = vmatpush1.bf16.msra.mxu0 %v104
  %646 = vmatprep.subr.bf16.mxu0 0
  %647 = vmatpush1.bf16.msra.mxu0 %v105
  %648 = vmatprep.subr.bf16.mxu0 0
  %649 = vmatpush1.bf16.msra.mxu0 0
  %650 = vmatprep.subr.bf16.mxu0 0
  %651 = vmatpush1.bf16.msra.mxu0 0
  %652 = vmatprep.subr.bf16.mxu0 0
  %653 = vmatpush1.bf16.msra.mxu0 0
  %654 = vmatprep.subr.bf16.mxu0 0
  %655 = vmatpush1.bf16.msra.mxu0 0
  %656 = vmatprep.subr.bf16.mxu0 0
  %657 = vmatpush1.bf16.msra.mxu0 0
  %658 = vmatprep.subr.bf16.mxu0 0
  %659 = vmatpush1.bf16.msra.mxu0 0
  %660 = vmatprep.subr.bf16.mxu0 0
  %661 = vmatpush1.bf16.msra.mxu0 0
  %662 = vmatprep.subr.bf16.mxu0 0
  %663 = vmatpush1.bf16.msra.mxu0 0
  %664 = vmatprep.subr.bf16.mxu0 0
  %665 = vmatpush1.bf16.msra.mxu0 0
  %666 = vmatprep.subr.bf16.mxu0 0
  %667 = vmatpush1.bf16.msra.mxu0 0
  %668 = vmatprep.subr.bf16.mxu0 0
  %669 = vmatpush1.bf16.msra.mxu0 0
  %670 = vmatprep.subr.bf16.mxu0 0
  %671 = vmatpush1.bf16.msra.mxu0 0
  %672 = vmatprep.subr.bf16.mxu0 0
  %673 = vmatpush1.bf16.msra.mxu0 0
  %674 = vmatprep.subr.bf16.mxu0 0
  %675 = vmatpush1.bf16.msra.mxu0 0
  %676 = vmatprep.mubr.bf16.mxu0 0
  %677 = vmatmul.mubr.bf16.gmra.mrb[0].mxu0 %v642
  %v678 = vpop.f32.mrb[0].mxu0
  %v679 = vadd.f32 0.0, %v678
  %v680 = vpop.f32.mrb[0].mxu0
  %v681 = vpop.f32.mrb[0].mxu0
  %v682 = vpop.f32.mrb[0].mxu0
  %683 = vdwg.mxu0
  %v684 = vadd.f32 %v636, %v679
  %v685 = vmul.f32 %v684, 0.5
  %v686 = vtanh.pop %v685
  %v687 = vadd.f32 %v686, 1.0
  %v688 = vmul.f32 %v687, 0.5
  %v689 = vtanh.pop %v684
  %v690 = vmul.f32 %v688, %v624
  %692 = vrot.lane.b32.xlu0 %v689, 64
  %v693 = vpop.permute.xlu0 %692
  %v695 = vmul.f32 %v688, %v693
  %697 = vrot.lane.b32.xlu0 %v695, 32
  %v698 = vpop.permute.xlu0 %697
  %v700 = vadd.f32 %v690, %v698
  %v701 = vtanh.pop %v700
  %703 = vrot.lane.b32.xlu0 %v701, 64
  %v704 = vpop.permute.xlu0 %703
  %v706 = vmul.f32 %v688, %v704
  %708 = vrot.lane.b32.xlu0 %v706, 32
  %v709 = vpop.permute.xlu0 %708
  %711 = vst.msk [vmem:[%s4 + $0x7] sm:$0x1] %vm178, %v709
  %v712 = vld [vmem:[#allocation2 + $0x8] sm:$0x1]
  %v713 = vpack.c.bf16 %v706, %v706
  %715 = vrot.lane.b32.xlu0 %v713, 32
  %v716 = vpop.permute.xlu0 %715
  %v718 = vsel %vm44, %v716, 0
  %720 = vmatprep.subr.bf16.mxu0 0
  %721 = vmatpush1.bf16.msra.mxu0 %v104
  %722 = vmatprep.subr.bf16.mxu0 0
  %723 = vmatpush1.bf16.msra.mxu0 %v105
  %724 = vmatprep.subr.bf16.mxu0 0
  %725 = vmatpush1.bf16.msra.mxu0 0
  %726 = vmatprep.subr.bf16.mxu0 0
  %727 = vmatpush1.bf16.msra.mxu0 0
  %728 = vmatprep.subr.bf16.mxu0 0
  %729 = vmatpush1.bf16.msra.mxu0 0
  %730 = vmatprep.subr.bf16.mxu0 0
  %731 = vmatpush1.bf16.msra.mxu0 0
  %732 = vmatprep.subr.bf16.mxu0 0
  %733 = vmatpush1.bf16.msra.mxu0 0
  %734 = vmatprep.subr.bf16.mxu0 0
  %735 = vmatpush1.bf16.msra.mxu0 0
  %736 = vmatprep.subr.bf16.mxu0 0
  %737 = vmatpush1.bf16.msra.mxu0 0
  %738 = vmatprep.subr.bf16.mxu0 0
  %739 = vmatpush1.bf16.msra.mxu0 0
  %740 = vmatprep.subr.bf16.mxu0 0
  %741 = vmatpush1.bf16.msra.mxu0 0
  %742 = vmatprep.subr.bf16.mxu0 0
  %743 = vmatpush1.bf16.msra.mxu0 0
  %744 = vmatprep.subr.bf16.mxu0 0
  %745 = vmatpush1.bf16.msra.mxu0 0
  %746 = vmatprep.subr.bf16.mxu0 0
  %747 = vmatpush1.bf16.msra.mxu0 0
  %748 = vmatprep.subr.bf16.mxu0 0
  %749 = vmatpush1.bf16.msra.mxu0 0
  %750 = vmatprep.subr.bf16.mxu0 0
  %751 = vmatpush1.bf16.msra.mxu0 0
  %752 = vmatprep.mubr.bf16.mxu0 0
  %753 = vmatmul.mubr.bf16.gmra.mrb[0].mxu0 %v718
  %v754 = vpop.f32.mrb[0].mxu0
  %v755 = vadd.f32 0.0, %v754
  %v756 = vpop.f32.mrb[0].mxu0
  %v757 = vpop.f32.mrb[0].mxu0
  %v758 = vpop.f32.mrb[0].mxu0
  %759 = vdwg.mxu0
  %v760 = vadd.f32 %v712, %v755
  %v761 = vmul.f32 %v760, 0.5
  %v762 = vtanh.pop %v761
  %v763 = vadd.f32 %v762, 1.0
  %v764 = vmul.f32 %v763, 0.5
  %v765 = vtanh.pop %v760
  %v766 = vmul.f32 %v764, %v700
  %768 = vrot.lane.b32.xlu0 %v765, 64
  %v769 = vpop.permute.xlu0 %768
  %v771 = vmul.f32 %v764, %v769
  %773 = vrot.lane.b32.xlu0 %v771, 32
  %v774 = vpop.permute.xlu0 %773
  %v776 = vadd.f32 %v766, %v774
  %v777 = vtanh.pop %v776
  %779 = vrot.lane.b32.xlu0 %v777, 64
  %v780 = vpop.permute.xlu0 %779
  %v782 = vmul.f32 %v764, %v780
  %784 = vrot.lane.b32.xlu0 %v782, 32
  %v785 = vpop.permute.xlu0 %784
  %787 = vst.msk [vmem:[%s4 + $0x8] sm:$0x1] %vm178, %v785
  %v788 = vld [vmem:[#allocation2 + $0x9] sm:$0x1]
  %v789 = vpack.c.bf16 %v782, %v782
  %791 = vrot.lane.b32.xlu0 %v789, 32
  %v792 = vpop.permute.xlu0 %791
  %v794 = vsel %vm44, %v792, 0
  %796 = vmatprep.subr.bf16.mxu0 0
  %797 = vmatpush1.bf16.msra.mxu0 %v104
  %798 = vmatprep.subr.bf16.mxu0 0
  %799 = vmatpush1.bf16.msra.mxu0 %v105
  %800 = vmatprep.subr.bf16.mxu0 0
  %801 = vmatpush1.bf16.msra.mxu0 0
  %802 = vmatprep.subr.bf16.mxu0 0
  %803 = vmatpush1.bf16.msra.mxu0 0
  %804 = vmatprep.subr.bf16.mxu0 0
  %805 = vmatpush1.bf16.msra.mxu0 0
  %806 = vmatprep.subr.bf16.mxu0 0
  %807 = vmatpush1.bf16.msra.mxu0 0
  %808 = vmatprep.subr.bf16.mxu0 0
  %809 = vmatpush1.bf16.msra.mxu0 0
  %810 = vmatprep.subr.bf16.mxu0 0
  %811 = vmatpush1.bf16.msra.mxu0 0
  %812 = vmatprep.subr.bf16.mxu0 0
  %813 = vmatpush1.bf16.msra.mxu0 0
  %814 = vmatprep.subr.bf16.mxu0 0
  %815 = vmatpush1.bf16.msra.mxu0 0
  %816 = vmatprep.subr.bf16.mxu0 0
  %817 = vmatpush1.bf16.msra.mxu0 0
  %818 = vmatprep.subr.bf16.mxu0 0
  %819 = vmatpush1.bf16.msra.mxu0 0
  %820 = vmatprep.subr.bf16.mxu0 0
  %821 = vmatpush1.bf16.msra.mxu0 0
  %822 = vmatprep.subr.bf16.mxu0 0
  %823 = vmatpush1.bf16.msra.mxu0 0
  %824 = vmatprep.subr.bf16.mxu0 0
  %825 = vmatpush1.bf16.msra.mxu0 0
  %826 = vmatprep.subr.bf16.mxu0 0
  %827 = vmatpush1.bf16.msra.mxu0 0
  %828 = vmatprep.mubr.bf16.mxu0 0
  %829 = vmatmul.mubr.bf16.gmra.mrb[0].mxu0 %v794
  %v830 = vpop.f32.mrb[0].mxu0
  %v831 = vadd.f32 0.0, %v830
  %v832 = vpop.f32.mrb[0].mxu0
  %v833 = vpop.f32.mrb[0].mxu0
  %v834 = vpop.f32.mrb[0].mxu0
  %835 = vdwg.mxu0
  %v836 = vadd.f32 %v788, %v831
  %v837 = vmul.f32 %v836, 0.5
  %v838 = vtanh.pop %v837
  %v839 = vadd.f32 %v838, 1.0
  %v840 = vmul.f32 %v839, 0.5
  %v841 = vtanh.pop %v836
  %v842 = vmul.f32 %v840, %v776
  %844 = vrot.lane.b32.xlu0 %v841, 64
  %v845 = vpop.permute.xlu0 %844
  %v847 = vmul.f32 %v840, %v845
  %849 = vrot.lane.b32.xlu0 %v847, 32
  %v850 = vpop.permute.xlu0 %849
  %v852 = vadd.f32 %v842, %v850
  %v853 = vtanh.pop %v852
  %855 = vrot.lane.b32.xlu0 %v853, 64
  %v856 = vpop.permute.xlu0 %855
  %v858 = vmul.f32 %v840, %v856
  %860 = vrot.lane.b32.xlu0 %v858, 32
  %v861 = vpop.permute.xlu0 %860
  %863 = vst.msk [vmem:[%s4 + $0x9] sm:$0x1] %vm178, %v861
  // Predicated region
  $region18: #{lstm_forward.1} parent=0 // pred_check
    _
  $region19: #{lstm_forward.1} parent=0 // pred_check_branch
    %865 = sbr.rel (0) target = $region21
  $region20: #{lstm_forward.1} parent=0 // pred_region
    _
  $region21: #{lstm_forward.1} parent=0 // pred_fallthru
    _
  // Predicated region
  $region22: #{lstm_forward.1} parent=0 // pred_check
    _
  $region23: #{lstm_forward.1} parent=0 // pred_check_branch
    %867 = sbr.rel (0) target = $region25
  $region24: #{lstm_forward.1} parent=0 // pred_region
    _
  $region25: #{lstm_forward.1} parent=0 // pred_fallthru
    _

</llo_original>
